<compile_context>
chip_gen: v7x
topology: tpu7x:2x2x1
jax: 0.10.0
libtpu: 0.0.40
codegen_flags: <defaults>
</compile_context>

<pallas_src>
import functools

import jax
import jax.numpy as jnp
from jax.experimental import pallas as pl
from jax.experimental.pallas import tpu as pltpu


def _use_bf16_activations() -> bool:
    """bf16 VPU/EUP exists on v6e/v7x; older chips would pay pack/unpack filler."""
    try:
        kind = jax.devices()[0].device_kind.lower()
    except Exception:
        return False
    return ("v6" in kind) or ("v7" in kind)


_ACT_DTYPE = jnp.bfloat16 if _use_bf16_activations() else jnp.float32


def mlp_kernel(x_ref, w0_ref, b0_ref, w1_ref, b1_ref,
               w2_ref, b2_ref, w3_ref, b3_ref, o_ref, *, act_dtype):
    # x_ref: (8, TM) f32 | w_i: (out_i, in_i) f32 | b_i: (out_i, 1) f32 | o_ref: (2, TM) f32
    # Batch lives on the lane axis, so every intermediate and the output are lane-dense.
    # Accumulation and bias adds are always f32; sigmoid (and the operands of the
    # following matmul) use act_dtype (bf16 on v6e/v7x, f32 on v5e).
    f32 = jnp.float32
    h = jnp.dot(w0_ref[...], x_ref[...], preferred_element_type=f32) + b0_ref[...]
    h = jax.nn.sigmoid(h.astype(act_dtype))
    h = jnp.dot(w1_ref[...].astype(act_dtype), h, preferred_element_type=f32) + b1_ref[...]
    h = jax.nn.sigmoid(h.astype(act_dtype))
    h = jnp.dot(w2_ref[...].astype(act_dtype), h, preferred_element_type=f32) + b2_ref[...]
    h = jax.nn.sigmoid(h.astype(act_dtype))
    h = jnp.dot(w3_ref[...].astype(act_dtype), h, preferred_element_type=f32) + b3_ref[...]
    o_ref[...] = h.astype(o_ref.dtype)


def _round_up(n, m):
    return -(-n // m) * m


def _choose_tile(b, tm_max):
    """Pick (TM, padded_B): lane-aligned tiles, >=2 grid steps when possible (v7x),
    minimal ragged-tail padding."""
    b128 = _round_up(max(b, 1), 128)
    tm_max = max(128, _round_up(tm_max, 128))
    if b128 <= 128:
        return 128, 128
    n_tiles = max(2, -(-b128 // tm_max))          # >=2 so both v7x TensorCores get work
    tm = _round_up(-(-b128 // n_tiles), 128)      # <= tm_max by construction
    return tm, n_tiles * tm


@functools.partial(jax.jit, static_argnames=("tm_max",))
def mlp_forward_t(xt, params, *, tm_max=32768):
    """Native-layout entry point: xt (8, B) f32 -> (2, B) f32.  No layout glue."""
    assert xt.shape[0] == 8, xt.shape
    xt = xt.astype(jnp.float32)
    B = xt.shape[1]
    TM, Bp = _choose_tile(B, tm_max)
    grid = (Bp // TM,)
    if Bp != B:
        xt = jnp.pad(xt, ((0, 0), (0, Bp - B)))   # ragged tail only (no full zeros+set)

    w = [params[f"w{i}"].astype(jnp.float32) for i in range(4)]                 # (out, in)
    b = [params[f"b{i}"].astype(jnp.float32).reshape(-1, 1) for i in range(4)]  # (out, 1)

    const = lambda a: pl.BlockSpec(a.shape, lambda i: (0, 0))   # VMEM-resident across grid
    in_specs = [pl.BlockSpec((8, TM), lambda i: (0, i)),        # x tile, double-buffered
                const(w[0]), const(b[0]), const(w[1]), const(b[1]),
                const(w[2]), const(b[2]), const(w[3]), const(b[3])]

    param_bytes = sum(a.size * 4 for a in w) + sum(a.size * 4 for a in b)

    out_t = pl.pallas_call(
        functools.partial(mlp_kernel, act_dtype=_ACT_DTYPE),
        out_shape=jax.ShapeDtypeStruct((2, Bp), jnp.float32),
        grid_spec=pltpu.PrefetchScalarGridSpec(
            num_scalar_prefetch=0,
            grid=grid,
            in_specs=in_specs,
            out_specs=pl.BlockSpec((2, TM), lambda i: (0, i)),
        ),
        compiler_params=pltpu.CompilerParams(
            dimension_semantics=("parallel",),          # megacore / v7x dual-TC sharding
            vmem_limit_bytes=48 * 1024 * 1024),         # headroom; worst case use ~16 MiB
        cost_estimate=pl.CostEstimate(
            flops=2 * Bp * (8 * 8 + 8 * 4 + 4 * 2 + 2 * 2),
            transcendentals=Bp * (8 + 4 + 2),
            bytes_accessed=8 * Bp * 4 + 2 * Bp * 4 + param_bytes),
    )(xt, w[0], b[0], w[1], b[1], w[2], b[2], w[3], b[3])

    return out_t[:, :B] if Bp != B else out_t


@functools.partial(jax.jit, static_argnames=("tm_max",))
def mlp_forward(x, params, *, tm_max=32768):
    """nn.Module-compatible entry point: x (B, 8) f32 -> (B, 2) f32.
    Prefer mlp_forward_t when the caller can adopt the (8, B)/(2, B) layout."""
    return mlp_forward_t(x.T, params, tm_max=tm_max).T


def init_params(key):
    """PyTorch nn.Linear-style init (uniform +-1/sqrt(fan_in)), PyTorch (out, in) layout."""
    dims = [(8, 8), (8, 4), (4, 2), (2, 2)]  # (in_features, out_features) per layer
    params = {}
    for i, (fan_in, fan_out) in enumerate(dims):
        key, kw, kb = jax.random.split(key, 3)
        bound = 1.0 / jnp.sqrt(fan_in)
        params[f"w{i}"] = jax.random.uniform(
            kw, (fan_out, fan_in), jnp.float32, minval=-bound, maxval=bound)
        params[f"b{i}"] = jax.random.uniform(
            kb, (fan_out,), jnp.float32, minval=-bound, maxval=bound)
    return params


def mlp_reference(x, params, act_dtype=None):
    """Pure-JAX reference mirroring the kernel's per-generation dtype choices
    (f32 accumulation everywhere; bf16 sigmoid/matmul operands on v6e/v7x)."""
    act_dtype = _ACT_DTYPE if act_dtype is None else act_dtype
    f32 = jnp.float32

    def linear(h, w, bias, in_dtype):
        return (jnp.dot(h.astype(in_dtype), w.T.astype(in_dtype),
                        preferred_element_type=f32) + bias.astype(f32))

    h = jax.nn.sigmoid(linear(x, params["w0"], params["b0"], f32).astype(act_dtype))
    h = jax.nn.sigmoid(linear(h, params["w1"], params["b1"], act_dtype).astype(act_dtype))
    h = jax.nn.sigmoid(linear(h, params["w2"], params["b2"], act_dtype).astype(act_dtype))
    return linear(h, params["w3"], params["b3"], act_dtype).astype(f32)


if __name__ == "__main__":
    key = jax.random.PRNGKey(0)
    key, kp = jax.random.split(key)
    params = init_params(kp)

    # Looser tolerance on v6e/v7x where sigmoid runs in bf16 (vs. a pure-f32 torch MLP
    # this is an intentional ~0.4%-relative precision trade for EUP throughput).
    tol = 1e-2 if _ACT_DTYPE == jnp.bfloat16 else 1e-4

    # nn.Module-compatible layout: aligned and ragged batch sizes.
    for B in (256, 200):
        x = jax.random.normal(jax.random.fold_in(key, B), (B, 8), jnp.float32)
        out = jax.block_until_ready(mlp_forward(x, params))
        ref = mlp_reference(x, params)
        assert out.shape == (B, 2), out.shape
        assert jnp.allclose(out, ref, atol=tol, rtol=tol), float(jnp.abs(out - ref).max())

    # Native lane-dense layout (zero wrapper transpose/pad passes).
    xt = jax.random.normal(key, (8, 256), jnp.float32)
    out_t = jax.block_until_ready(mlp_forward_t(xt, params))
    ref_t = mlp_reference(xt.T, params).T
    assert out_t.shape == (2, 256), out_t.shape
    assert jnp.allclose(out_t, ref_t, atol=tol, rtol=tol), float(jnp.abs(out_t - ref_t).max())

    print("KERNEL_OK")
</pallas_src>

<mosaic_0001>
module attributes {stable_mosaic.version = 11 : i64} {
  func.func @mlp_kernel(%arg0: i32, %arg1: memref<8x128xf32, #tpu.memory_space<vmem>>, %arg2: memref<8x8xf32, #tpu.memory_space<vmem>>, %arg3: memref<8x1xf32, #tpu.memory_space<vmem>>, %arg4: memref<4x8xf32, #tpu.memory_space<vmem>>, %arg5: memref<4x1xf32, #tpu.memory_space<vmem>>, %arg6: memref<2x4xf32, #tpu.memory_space<vmem>>, %arg7: memref<2x1xf32, #tpu.memory_space<vmem>>, %arg8: memref<2x2xf32, #tpu.memory_space<vmem>>, %arg9: memref<2x1xf32, #tpu.memory_space<vmem>>, %arg10: memref<2x128xf32, #tpu.memory_space<vmem>>) attributes {dimension_semantics = [#tpu.dimension_semantics<parallel>], iteration_bounds = array<i64: 2>, scalar_prefetch = 0 : i64, scratch_operands = 0 : i64, tpu.core_type = #tpu.core_type<tc>, window_params = [{transform_indices = @transform_0, window_bounds = array<i64: 8, 128>}, {pipeline_mode = #tpu.pipeline_mode<synchronous>, transform_indices = @transform_1, window_bounds = array<i64: 8, 8>}, {pipeline_mode = #tpu.pipeline_mode<synchronous>, transform_indices = @transform_2, window_bounds = array<i64: 8, 1>}, {pipeline_mode = #tpu.pipeline_mode<synchronous>, transform_indices = @transform_3, window_bounds = array<i64: 4, 8>}, {pipeline_mode = #tpu.pipeline_mode<synchronous>, transform_indices = @transform_4, window_bounds = array<i64: 4, 1>}, {pipeline_mode = #tpu.pipeline_mode<synchronous>, transform_indices = @transform_5, window_bounds = array<i64: 2, 4>}, {pipeline_mode = #tpu.pipeline_mode<synchronous>, transform_indices = @transform_6, window_bounds = array<i64: 2, 1>}, {pipeline_mode = #tpu.pipeline_mode<synchronous>, transform_indices = @transform_7, window_bounds = array<i64: 2, 2>}, {pipeline_mode = #tpu.pipeline_mode<synchronous>, transform_indices = @transform_8, window_bounds = array<i64: 2, 1>}, {transform_indices = @transform_9, window_bounds = array<i64: 2, 128>}]} {
    %c0 = arith.constant 0 : index
    %c0_0 = arith.constant 0 : index
    %0 = vector.load %arg2[%c0, %c0_0] : memref<8x8xf32, #tpu.memory_space<vmem>>, vector<8x8xf32>
    %c0_1 = arith.constant 0 : index
    %c0_2 = arith.constant 0 : index
    %1 = vector.load %arg1[%c0_1, %c0_2] : memref<8x128xf32, #tpu.memory_space<vmem>>, vector<8x128xf32>
    %cst = arith.constant dense<0.000000e+00> : vector<8x128xf32>
    %2 = tpu.matmul %0, %1, %cst {dimension_numbers = #tpu.dot_dimension_numbers<[1], [0], [0], [1], [0, 0, 1, 1], [], []>} : vector<8x8xf32>, vector<8x128xf32>, vector<8x128xf32> -> vector<8x128xf32>
    %c0_3 = arith.constant 0 : index
    %c0_4 = arith.constant 0 : index
    %3 = vector.load %arg3[%c0_3, %c0_4] : memref<8x1xf32, #tpu.memory_space<vmem>>, vector<8x1xf32>
    %4 = vector.broadcast %3 : vector<8x1xf32> to vector<8x128xf32>
    %5 = arith.addf %2, %4 : vector<8x128xf32>
    %6 = arith.negf %5 : vector<8x128xf32>
    %7 = math.exp %6 : vector<8x128xf32>
    %cst_5 = arith.constant 1.000000e+00 : f32
    %8 = vector.broadcast %cst_5 : f32 to vector<8x128xf32>
    %9 = arith.addf %8, %7 : vector<8x128xf32>
    %10 = arith.divf %8, %9 : vector<8x128xf32>
    %c0_6 = arith.constant 0 : index
    %c0_7 = arith.constant 0 : index
    %11 = vector.load %arg4[%c0_6, %c0_7] : memref<4x8xf32, #tpu.memory_space<vmem>>, vector<4x8xf32>
    %cst_8 = arith.constant dense<0.000000e+00> : vector<4x128xf32>
    %12 = tpu.matmul %11, %10, %cst_8 {dimension_numbers = #tpu.dot_dimension_numbers<[1], [0], [0], [1], [0, 0, 1, 1], [], []>} : vector<4x8xf32>, vector<8x128xf32>, vector<4x128xf32> -> vector<4x128xf32>
    %c0_9 = arith.constant 0 : index
    %c0_10 = arith.constant 0 : index
    %13 = vector.load %arg5[%c0_9, %c0_10] : memref<4x1xf32, #tpu.memory_space<vmem>>, vector<4x1xf32>
    %14 = vector.broadcast %13 : vector<4x1xf32> to vector<4x128xf32>
    %15 = arith.addf %12, %14 : vector<4x128xf32>
    %16 = arith.negf %15 : vector<4x128xf32>
    %17 = math.exp %16 : vector<4x128xf32>
    %cst_11 = arith.constant 1.000000e+00 : f32
    %18 = vector.broadcast %cst_11 : f32 to vector<4x128xf32>
    %19 = arith.addf %18, %17 : vector<4x128xf32>
    %20 = arith.divf %18, %19 : vector<4x128xf32>
    %c0_12 = arith.constant 0 : index
    %c0_13 = arith.constant 0 : index
    %21 = vector.load %arg6[%c0_12, %c0_13] : memref<2x4xf32, #tpu.memory_space<vmem>>, vector<2x4xf32>
    %cst_14 = arith.constant dense<0.000000e+00> : vector<2x128xf32>
    %22 = tpu.matmul %21, %20, %cst_14 {dimension_numbers = #tpu.dot_dimension_numbers<[1], [0], [0], [1], [0, 0, 1, 1], [], []>} : vector<2x4xf32>, vector<4x128xf32>, vector<2x128xf32> -> vector<2x128xf32>
    %c0_15 = arith.constant 0 : index
    %c0_16 = arith.constant 0 : index
    %23 = vector.load %arg7[%c0_15, %c0_16] : memref<2x1xf32, #tpu.memory_space<vmem>>, vector<2x1xf32>
    %24 = vector.broadcast %23 : vector<2x1xf32> to vector<2x128xf32>
    %25 = arith.addf %22, %24 : vector<2x128xf32>
    %26 = arith.negf %25 : vector<2x128xf32>
    %27 = math.exp %26 : vector<2x128xf32>
    %cst_17 = arith.constant 1.000000e+00 : f32
    %28 = vector.broadcast %cst_17 : f32 to vector<2x128xf32>
    %29 = arith.addf %28, %27 : vector<2x128xf32>
    %30 = arith.divf %28, %29 : vector<2x128xf32>
    %c0_18 = arith.constant 0 : index
    %c0_19 = arith.constant 0 : index
    %31 = vector.load %arg8[%c0_18, %c0_19] : memref<2x2xf32, #tpu.memory_space<vmem>>, vector<2x2xf32>
    %cst_20 = arith.constant dense<0.000000e+00> : vector<2x128xf32>
    %32 = tpu.matmul %31, %30, %cst_20 {dimension_numbers = #tpu.dot_dimension_numbers<[1], [0], [0], [1], [0, 0, 1, 1], [], []>} : vector<2x2xf32>, vector<2x128xf32>, vector<2x128xf32> -> vector<2x128xf32>
    %c0_21 = arith.constant 0 : index
    %c0_22 = arith.constant 0 : index
    %33 = vector.load %arg9[%c0_21, %c0_22] : memref<2x1xf32, #tpu.memory_space<vmem>>, vector<2x1xf32>
    %34 = vector.broadcast %33 : vector<2x1xf32> to vector<2x128xf32>
    %35 = arith.addf %32, %34 : vector<2x128xf32>
    %c0_23 = arith.constant 0 : index
    %c0_24 = arith.constant 0 : index
    %36 = vector.load %arg10[%c0_23, %c0_24] : memref<2x128xf32, #tpu.memory_space<vmem>>, vector<2x128xf32>
    tpu.vector_store %arg10[%c0_23, %c0_24], %35 {strides = array<i32>} : memref<2x128xf32, #tpu.memory_space<vmem>>, vector<2x128xf32>,
    return
  }
  func.func @transform_0(%arg0: i32) -> (i32, i32) {
    %c0_i32 = arith.constant 0 : i32
    %c0_i32_0 = arith.constant 0 : i32
    return %c0_i32, %arg0 : i32, i32
  }
  func.func @transform_1(%arg0: i32) -> (i32, i32) {
    %c0_i32 = arith.constant 0 : i32
    %c0_i32_0 = arith.constant 0 : i32
    %c0_i32_1 = arith.constant 0 : i32
    return %c0_i32, %c0_i32_0 : i32, i32
  }
  func.func @transform_2(%arg0: i32) -> (i32, i32) {
    %c0_i32 = arith.constant 0 : i32
    %c0_i32_0 = arith.constant 0 : i32
    %c0_i32_1 = arith.constant 0 : i32
    return %c0_i32, %c0_i32_0 : i32, i32
  }
  func.func @transform_3(%arg0: i32) -> (i32, i32) {
    %c0_i32 = arith.constant 0 : i32
    %c0_i32_0 = arith.constant 0 : i32
    %c0_i32_1 = arith.constant 0 : i32
    return %c0_i32, %c0_i32_0 : i32, i32
  }
  func.func @transform_4(%arg0: i32) -> (i32, i32) {
    %c0_i32 = arith.constant 0 : i32
    %c0_i32_0 = arith.constant 0 : i32
    %c0_i32_1 = arith.constant 0 : i32
    return %c0_i32, %c0_i32_0 : i32, i32
  }
  func.func @transform_5(%arg0: i32) -> (i32, i32) {
    %c0_i32 = arith.constant 0 : i32
    %c0_i32_0 = arith.constant 0 : i32
    %c0_i32_1 = arith.constant 0 : i32
    return %c0_i32, %c0_i32_0 : i32, i32
  }
  func.func @transform_6(%arg0: i32) -> (i32, i32) {
    %c0_i32 = arith.constant 0 : i32
    %c0_i32_0 = arith.constant 0 : i32
    %c0_i32_1 = arith.constant 0 : i32
    return %c0_i32, %c0_i32_0 : i32, i32
  }
  func.func @transform_7(%arg0: i32) -> (i32, i32) {
    %c0_i32 = arith.constant 0 : i32
    %c0_i32_0 = arith.constant 0 : i32
    %c0_i32_1 = arith.constant 0 : i32
    return %c0_i32, %c0_i32_0 : i32, i32
  }
  func.func @transform_8(%arg0: i32) -> (i32, i32) {
    %c0_i32 = arith.constant 0 : i32
    %c0_i32_0 = arith.constant 0 : i32
    %c0_i32_1 = arith.constant 0 : i32
    return %c0_i32, %c0_i32_0 : i32, i32
  }
  func.func @transform_9(%arg0: i32) -> (i32, i32) {
    %c0_i32 = arith.constant 0 : i32
    %c0_i32_0 = arith.constant 0 : i32
    return %c0_i32, %arg0 : i32, i32
  }
}

</mosaic_0001>

<llo_original>
// kernel: mlp_forward_t.1
$region0: #{mlp_forward_t.1}
  #allocation0 [shape = 'u32[]', space=smem, size = 0x4, offset = 0x4, fixed_abs, tag = 'smem constant byte address 0x4 - core index']
  #allocation1 [shape = 'u32[144,128]{1,0:T(1,128)}', space=vmem, size = 0x12000, scoped, tag = 'internal scratch']
  %s0 = inlined_call_operand.vmem [shape: f32[8,256], index: 0, kind: input, shape index: {}]
  %s1 = inlined_call_operand.vmem [shape: f32[8,8], index: 1, kind: input, shape index: {}]
  %s2 = inlined_call_operand.vmem [shape: f32[8,1], index: 2, kind: input, shape index: {}]
  %s3 = inlined_call_operand.vmem [shape: f32[4,8], index: 3, kind: input, shape index: {}]
  %s4 = inlined_call_operand.vmem [shape: f32[4,1], index: 4, kind: input, shape index: {}]
  %s5 = inlined_call_operand.vmem [shape: f32[2,4], index: 5, kind: input, shape index: {}]
  %s6 = inlined_call_operand.vmem [shape: f32[2,1], index: 6, kind: input, shape index: {}]
  %s7 = inlined_call_operand.vmem [shape: f32[2,2], index: 7, kind: input, shape index: {}]
  %s8 = inlined_call_operand.vmem [shape: f32[2,1], index: 8, kind: input, shape index: {}]
  %s9 = inlined_call_operand.hbm [shape: f32[2,256], index: 9, kind: output, shape index: {}]
  %s10 = sld [smem:[#allocation0]]
  $region69: #{mlp_forward_t.1} parent=0
    _
  %s12 = ssub.s32 1, %s10
  %s13 = scalar_select 0, %s12, %s10
  $region1: #{mlp_forward_t.1} parent=0
    #allocation2 [shape = 'u8[2048]{0}', space=vmem, size = 0x800, scoped, tag = 'output window, operand 0']
    #allocation3 [shape = 's32[2]{0}', space=sflag, size = 0x8, scoped, tag = 'scoped memory for mlp_forward_t.1']
    %14 = vsyncpa [#allocation3], 0
    %s15 = scalar_lea.sflag [#allocation3], 1
    %16 = vsyncpa %s15, 0
    loop: start=0, step=1, limit=4
    $region2: #{mlp_forward_t.1} parent=1 // loop_pre_header
      _
    $region3: #{mlp_forward_t.1} parent=1 // loop_header
      %s18 = sphi 0, %s22
      %p19 = scmp.ge.s32.totalorder %s18, 4
      %s28 = sphi 0, %s30
      %s31 = sphi 0, %s28
      %s32 = sphi 0, %s31
      %s48 = sphi 0, %s32
      %s52 = sphi 0, %s52
      %s54 = sphi 0, %s52
      %s55 = sphi 0, %s54
      %s69 = sphi 0, %s55
      %s73 = sphi 0, %s73
      %s75 = sphi 0, %s73
      %s76 = sphi 0, %s75
      %s90 = sphi 0, %s76
      %s94 = sphi 0, %s94
      %s96 = sphi 0, %s94
      %s97 = sphi 0, %s96
      %s111 = sphi 0, %s97
      %s115 = sphi 0, %s115
      %s117 = sphi 0, %s115
      %s118 = sphi 0, %s117
      %s132 = sphi 0, %s118
      %s136 = sphi 0, %s136
      %s138 = sphi 0, %s136
      %s139 = sphi 0, %s138
      %s153 = sphi 0, %s139
      %s157 = sphi 0, %s157
      %s159 = sphi 0, %s157
      %s160 = sphi 0, %s159
      %s174 = sphi 0, %s160
      %s178 = sphi 0, %s178
      %s180 = sphi 0, %s178
      %s181 = sphi 0, %s180
      %s195 = sphi 0, %s181
      %s199 = sphi 0, %s199
      %s201 = sphi 0, %s199
      %s202 = sphi 0, %s201
      %s216 = sphi 0, %s202
      %s222 = sphi 0, %s224
      %s225 = sphi 0, %s222
      %s226 = sphi 0, %s225
      %s242 = sphi 0, %s226
    $region4: #{mlp_forward_t.1} parent=1 // loop_header_branch
      %21 = sbr.rel (%p19) target = $region8
    $region5: #{mlp_forward_t.1} parent=1 // loop_body
      %s23 = ssub.s32 %s18, 1
      %s24 = ssub.s32 %s18, 2
      %s25 = sadd.s32 %s18, 1
      %s26 = ssub.s32 %s18, %s25
      %p27 = scmp.eq.s32.totalorder %s26, 0
      %s29 = sadd.s32 %s28, 1
      %s30 = scalar_select %p27, %s28, %s29
      %p33 = pneg %p27
      %p34 = scmp.eq.s32.totalorder %s18, 1
      %p35 = por %p33, %p34
      %p36 = scmp.ne.s32.totalorder %s28, %s31
      %p37 = scmp.eq.s32.totalorder %s18, 0
      %p38 = por %p36, %p37
      %p39 = scmp.ne.s32.totalorder %s28, %s31
      %p40 = scmp.eq.s32.totalorder %s23, 1
      %p41 = por %p39, %p40
      %p42 = scmp.ne.s32.totalorder %s31, %s32
      %p43 = scmp.eq.s32.totalorder %s23, 0
      %p44 = por %p42, %p43
      %p45 = scmp.ne.s32.totalorder %s31, %s32
      %p46 = scmp.eq.s32.totalorder %s24, 1
      %p47 = por %p45, %p46
      %p49 = scmp.ne.s32.totalorder %s32, %s48
      %p50 = scmp.eq.s32.totalorder %s24, 0
      %p51 = por %p49, %p50
      %s53 = sadd.s32 %s52, 1
      %p56 = scmp.eq.s32.totalorder %s18, 1
      %p57 = scmp.ne.s32.totalorder %s52, %s54
      %p58 = scmp.eq.s32.totalorder %s18, 0
      %p59 = por %p57, %p58
      %p60 = scmp.ne.s32.totalorder %s52, %s54
      %p61 = scmp.eq.s32.totalorder %s23, 1
      %p62 = por %p60, %p61
      %p63 = scmp.ne.s32.totalorder %s54, %s55
      %p64 = scmp.eq.s32.totalorder %s23, 0
      %p65 = por %p63, %p64
      %p66 = scmp.ne.s32.totalorder %s54, %s55
      %p67 = scmp.eq.s32.totalorder %s24, 1
      %p68 = por %p66, %p67
      %p70 = scmp.ne.s32.totalorder %s55, %s69
      %p71 = scmp.eq.s32.totalorder %s24, 0
      %p72 = por %p70, %p71
      %s74 = sadd.s32 %s73, 1
      %p77 = scmp.eq.s32.totalorder %s18, 1
      %p78 = scmp.ne.s32.totalorder %s73, %s75
      %p79 = scmp.eq.s32.totalorder %s18, 0
      %p80 = por %p78, %p79
      %p81 = scmp.ne.s32.totalorder %s73, %s75
      %p82 = scmp.eq.s32.totalorder %s23, 1
      %p83 = por %p81, %p82
      %p84 = scmp.ne.s32.totalorder %s75, %s76
      %p85 = scmp.eq.s32.totalorder %s23, 0
      %p86 = por %p84, %p85
      %p87 = scmp.ne.s32.totalorder %s75, %s76
      %p88 = scmp.eq.s32.totalorder %s24, 1
      %p89 = por %p87, %p88
      %p91 = scmp.ne.s32.totalorder %s76, %s90
      %p92 = scmp.eq.s32.totalorder %s24, 0
      %p93 = por %p91, %p92
      %s95 = sadd.s32 %s94, 1
      %p98 = scmp.eq.s32.totalorder %s18, 1
      %p99 = scmp.ne.s32.totalorder %s94, %s96
      %p100 = scmp.eq.s32.totalorder %s18, 0
      %p101 = por %p99, %p100
      %p102 = scmp.ne.s32.totalorder %s94, %s96
      %p103 = scmp.eq.s32.totalorder %s23, 1
      %p104 = por %p102, %p103
      %p105 = scmp.ne.s32.totalorder %s96, %s97
      %p106 = scmp.eq.s32.totalorder %s23, 0
      %p107 = por %p105, %p106
      %p108 = scmp.ne.s32.totalorder %s96, %s97
      %p109 = scmp.eq.s32.totalorder %s24, 1
      %p110 = por %p108, %p109
      %p112 = scmp.ne.s32.totalorder %s97, %s111
      %p113 = scmp.eq.s32.totalorder %s24, 0
      %p114 = por %p112, %p113
      %s116 = sadd.s32 %s115, 1
      %p119 = scmp.eq.s32.totalorder %s18, 1
      %p120 = scmp.ne.s32.totalorder %s115, %s117
      %p121 = scmp.eq.s32.totalorder %s18, 0
      %p122 = por %p120, %p121
      %p123 = scmp.ne.s32.totalorder %s115, %s117
      %p124 = scmp.eq.s32.totalorder %s23, 1
      %p125 = por %p123, %p124
      %p126 = scmp.ne.s32.totalorder %s117, %s118
      %p127 = scmp.eq.s32.totalorder %s23, 0
      %p128 = por %p126, %p127
      %p129 = scmp.ne.s32.totalorder %s117, %s118
      %p130 = scmp.eq.s32.totalorder %s24, 1
      %p131 = por %p129, %p130
      %p133 = scmp.ne.s32.totalorder %s118, %s132
      %p134 = scmp.eq.s32.totalorder %s24, 0
      %p135 = por %p133, %p134
      %s137 = sadd.s32 %s136, 1
      %p140 = scmp.eq.s32.totalorder %s18, 1
      %p141 = scmp.ne.s32.totalorder %s136, %s138
      %p142 = scmp.eq.s32.totalorder %s18, 0
      %p143 = por %p141, %p142
      %p144 = scmp.ne.s32.totalorder %s136, %s138
      %p145 = scmp.eq.s32.totalorder %s23, 1
      %p146 = por %p144, %p145
      %p147 = scmp.ne.s32.totalorder %s138, %s139
      %p148 = scmp.eq.s32.totalorder %s23, 0
      %p149 = por %p147, %p148
      %p150 = scmp.ne.s32.totalorder %s138, %s139
      %p151 = scmp.eq.s32.totalorder %s24, 1
      %p152 = por %p150, %p151
      %p154 = scmp.ne.s32.totalorder %s139, %s153
      %p155 = scmp.eq.s32.totalorder %s24, 0
      %p156 = por %p154, %p155
      %s158 = sadd.s32 %s157, 1
      %p161 = scmp.eq.s32.totalorder %s18, 1
      %p162 = scmp.ne.s32.totalorder %s157, %s159
      %p163 = scmp.eq.s32.totalorder %s18, 0
      %p164 = por %p162, %p163
      %p165 = scmp.ne.s32.totalorder %s157, %s159
      %p166 = scmp.eq.s32.totalorder %s23, 1
      %p167 = por %p165, %p166
      %p168 = scmp.ne.s32.totalorder %s159, %s160
      %p169 = scmp.eq.s32.totalorder %s23, 0
      %p170 = por %p168, %p169
      %p171 = scmp.ne.s32.totalorder %s159, %s160
      %p172 = scmp.eq.s32.totalorder %s24, 1
      %p173 = por %p171, %p172
      %p175 = scmp.ne.s32.totalorder %s160, %s174
      %p176 = scmp.eq.s32.totalorder %s24, 0
      %p177 = por %p175, %p176
      %s179 = sadd.s32 %s178, 1
      %p182 = scmp.eq.s32.totalorder %s18, 1
      %p183 = scmp.ne.s32.totalorder %s178, %s180
      %p184 = scmp.eq.s32.totalorder %s18, 0
      %p185 = por %p183, %p184
      %p186 = scmp.ne.s32.totalorder %s178, %s180
      %p187 = scmp.eq.s32.totalorder %s23, 1
      %p188 = por %p186, %p187
      %p189 = scmp.ne.s32.totalorder %s180, %s181
      %p190 = scmp.eq.s32.totalorder %s23, 0
      %p191 = por %p189, %p190
      %p192 = scmp.ne.s32.totalorder %s180, %s181
      %p193 = scmp.eq.s32.totalorder %s24, 1
      %p194 = por %p192, %p193
      %p196 = scmp.ne.s32.totalorder %s181, %s195
      %p197 = scmp.eq.s32.totalorder %s24, 0
      %p198 = por %p196, %p197
      %s200 = sadd.s32 %s199, 1
      %p203 = scmp.eq.s32.totalorder %s18, 1
      %p204 = scmp.ne.s32.totalorder %s199, %s201
      %p205 = scmp.eq.s32.totalorder %s18, 0
      %p206 = por %p204, %p205
      %p207 = scmp.ne.s32.totalorder %s199, %s201
      %p208 = scmp.eq.s32.totalorder %s23, 1
      %p209 = por %p207, %p208
      %p210 = scmp.ne.s32.totalorder %s201, %s202
      %p211 = scmp.eq.s32.totalorder %s23, 0
      %p212 = por %p210, %p211
      %p213 = scmp.ne.s32.totalorder %s201, %s202
      %p214 = scmp.eq.s32.totalorder %s24, 1
      %p215 = por %p213, %p214
      %p217 = scmp.ne.s32.totalorder %s202, %s216
      %p218 = scmp.eq.s32.totalorder %s24, 0
      %p219 = por %p217, %p218
      %s220 = ssub.s32 %s18, %s25
      %p221 = scmp.eq.s32.totalorder %s220, 0
      %s223 = sadd.s32 %s222, 1
      %s224 = scalar_select %p221, %s222, %s223
      %p227 = pneg %p221
      %p228 = scmp.eq.s32.totalorder %s18, 1
      %p229 = por %p227, %p228
      %p230 = scmp.ne.s32.totalorder %s222, %s225
      %p231 = scmp.eq.s32.totalorder %s18, 0
      %p232 = por %p230, %p231
      %p233 = scmp.ne.s32.totalorder %s222, %s225
      %p234 = scmp.eq.s32.totalorder %s23, 1
      %p235 = por %p233, %p234
      %p236 = scmp.ne.s32.totalorder %s225, %s226
      %p237 = scmp.eq.s32.totalorder %s23, 0
      %p238 = por %p236, %p237
      %p239 = scmp.ne.s32.totalorder %s225, %s226
      %p240 = scmp.eq.s32.totalorder %s24, 1
      %p241 = por %p239, %p240
      %p243 = scmp.ne.s32.totalorder %s226, %s242
      %p244 = scmp.eq.s32.totalorder %s24, 0
      %p245 = por %p243, %p244
      %p246 = scmp.le.s32.totalorder 1, %s18
      %p247 = scmp.lt.s32.totalorder %s18, 3
      %p248 = pnand %p246, %p247
      %p249 = pneg %p248
      // Predicated region
      $region9: #{mlp_forward_t.1} parent=5 // pred_check
        _
      $region10: #{mlp_forward_t.1} parent=5 // pred_check_branch
        %251 = sbr.rel (%p248) target = $region12
      $region11: #{mlp_forward_t.1} parent=5 // pred_region
        %s252 = ssub.s32 %s18, 1
        // Predicated region
        $region13: #{mlp_forward_t.1} parent=11 // pred_check
          %p253 = pneg %p65
        $region14: #{mlp_forward_t.1} parent=11 // pred_check_branch
          %255 = sbr.rel (%p253) target = $region16
        $region15: #{mlp_forward_t.1} parent=11 // pred_region
          _
        $region16: #{mlp_forward_t.1} parent=11 // pred_fallthru
          _
        // Predicated region
        $region17: #{mlp_forward_t.1} parent=11 // pred_check
          %p256 = pneg %p86
        $region18: #{mlp_forward_t.1} parent=11 // pred_check_branch
          %258 = sbr.rel (%p256) target = $region20
        $region19: #{mlp_forward_t.1} parent=11 // pred_region
          _
        $region20: #{mlp_forward_t.1} parent=11 // pred_fallthru
          _
        // Predicated region
        $region21: #{mlp_forward_t.1} parent=11 // pred_check
          %p259 = pneg %p107
        $region22: #{mlp_forward_t.1} parent=11 // pred_check_branch
          %261 = sbr.rel (%p259) target = $region24
        $region23: #{mlp_forward_t.1} parent=11 // pred_region
          _
        $region24: #{mlp_forward_t.1} parent=11 // pred_fallthru
          _
        // Predicated region
        $region25: #{mlp_forward_t.1} parent=11 // pred_check
          %p262 = pneg %p128
        $region26: #{mlp_forward_t.1} parent=11 // pred_check_branch
          %264 = sbr.rel (%p262) target = $region28
        $region27: #{mlp_forward_t.1} parent=11 // pred_region
          _
        $region28: #{mlp_forward_t.1} parent=11 // pred_fallthru
          _
        // Predicated region
        $region29: #{mlp_forward_t.1} parent=11 // pred_check
          %p265 = pneg %p149
        $region30: #{mlp_forward_t.1} parent=11 // pred_check_branch
          %267 = sbr.rel (%p265) target = $region32
        $region31: #{mlp_forward_t.1} parent=11 // pred_region
          _
        $region32: #{mlp_forward_t.1} parent=11 // pred_fallthru
          _
        // Predicated region
        $region33: #{mlp_forward_t.1} parent=11 // pred_check
          %p268 = pneg %p170
        $region34: #{mlp_forward_t.1} parent=11 // pred_check_branch
          %270 = sbr.rel (%p268) target = $region36
        $region35: #{mlp_forward_t.1} parent=11 // pred_region
          _
        $region36: #{mlp_forward_t.1} parent=11 // pred_fallthru
          _
        // Predicated region
        $region37: #{mlp_forward_t.1} parent=11 // pred_check
          %p271 = pneg %p191
        $region38: #{mlp_forward_t.1} parent=11 // pred_check_branch
          %273 = sbr.rel (%p271) target = $region40
        $region39: #{mlp_forward_t.1} parent=11 // pred_region
          _
        $region40: #{mlp_forward_t.1} parent=11 // pred_fallthru
          _
        // Predicated region
        $region41: #{mlp_forward_t.1} parent=11 // pred_check
          %p274 = pneg %p212
        $region42: #{mlp_forward_t.1} parent=11 // pred_check_branch
          %276 = sbr.rel (%p274) target = $region44
        $region43: #{mlp_forward_t.1} parent=11 // pred_region
          _
        $region44: #{mlp_forward_t.1} parent=11 // pred_fallthru
          _
      $region12: #{mlp_forward_t.1} parent=5 // pred_fallthru
        _
      %p277 = scmp.lt.s32.totalorder %s18, 2
      // Predicated region
      $region45: #{mlp_forward_t.1} parent=5 // pred_check
        %p278 = pneg %p277
      $region46: #{mlp_forward_t.1} parent=5 // pred_check_branch
        %280 = sbr.rel (%p278) target = $region48
      $region47: #{mlp_forward_t.1} parent=5 // pred_region
        // Predicated region
        $region49: #{mlp_forward_t.1} parent=47 // pred_check
          %p281 = pneg %p38
        $region50: #{mlp_forward_t.1} parent=47 // pred_check_branch
          %283 = sbr.rel (%p281) target = $region52
        $region51: #{mlp_forward_t.1} parent=47 // pred_region
          %p284 = scmp.lt.s32.totalorder %s18, 1
          %s285 = scalar_select %p284, %s18, 1
          %s286 = smul.addr %s285, 8
          %s287 = scalar_lea.vmem %s0, %s286
        $region52: #{mlp_forward_t.1} parent=47 // pred_fallthru
          _
      $region48: #{mlp_forward_t.1} parent=5 // pred_fallthru
        _
      %p288 = scmp.le.s32.totalorder 1, %s18
      %p289 = scmp.lt.s32.totalorder %s18, 3
      %p290 = pnand %p288, %p289
      %p291 = pneg %p290
      // Predicated region
      $region53: #{mlp_forward_t.1} parent=5 // pred_check
        _
      $region54: #{mlp_forward_t.1} parent=5 // pred_check_branch
        %293 = sbr.rel (%p290) target = $region56
      $region55: #{mlp_forward_t.1} parent=5 // pred_region
        %s294 = ssub.s32 %s18, 1
        %p295 = scmp.lt.s32.totalorder %s23, 1
        %s296 = scalar_select %p295, %s23, 1
        %s297 = smul.addr %s296, 8
        %s298 = scalar_lea.vmem %s0, %s297
        %p299 = pneg %p44
        %p300 = pneg %p41
        %p301 = pneg %p65
        %p302 = pneg %p62
        %p303 = pneg %p86
        %p304 = pneg %p83
        %p305 = pneg %p107
        %p306 = pneg %p104
        %p307 = pneg %p128
        %p308 = pneg %p125
        %p309 = pneg %p149
        %p310 = pneg %p146
        %p311 = pneg %p170
        %p312 = pneg %p167
        %p313 = pneg %p191
        %p314 = pneg %p188
        %p315 = pneg %p212
        %p316 = pneg %p209
        %p317 = pneg %p238
        %p318 = pneg %p235
        %s319 = sand.u32 %s225, 1
        %s320 = scalar_lea.sflag [#allocation3], %s319
        %s321 = sand.u32 %s225, 1
        %s322 = smul.addr %s321, 2
        %s323 = scalar_lea.vmem [#allocation2], %s322
        %p324 = scmp.lt.s32.totalorder %s23, 1
        %s325 = scalar_select %p324, %s23, 1
        %s326 = smul.addr %s325, 8
        %s327 = scalar_lea.vmem %s0, %s326
        %v328 = vld [vmem:[%s1] sm:$0xff]
        %v329 = vld [vmem:[%s327] sm:$0xff]
        %v330 = vld [vmem:[%s2] sm:$0xff]
        %332 = vset.pattern.permute.xlu0 0
        %333 = vperm.xlu0 %332, %v330
        %v334 = vpop.permute.xlu0 %333
        %vm336 = vcmask 64512
        %v338 = vsel %vm336, %v328, 0
        %340 = vmatprep.subr.mxu0 0.0
        %341 = vmatpush1.msra.mxu0 %v329
        %342 = vmatprep.subr.mxu0 0.0
        %343 = vmatpush1.msra.mxu0 0.0
        %344 = vmatprep.subr.mxu0 0.0
        %345 = vmatpush1.msra.mxu0 0.0
        %346 = vmatprep.subr.mxu0 0.0
        %347 = vmatpush1.msra.mxu0 0.0
        %348 = vmatprep.subr.mxu0 0.0
        %349 = vmatpush1.msra.mxu0 0.0
        %350 = vmatprep.subr.mxu0 0.0
        %351 = vmatpush1.msra.mxu0 0.0
        %352 = vmatprep.subr.mxu0 0.0
        %353 = vmatpush1.msra.mxu0 0.0
        %354 = vmatprep.subr.mxu0 0.0
        %355 = vmatpush1.msra.mxu0 0.0
        %356 = vmatprep.subr.mxu0 0.0
        %357 = vmatpush1.msra.mxu0 0.0
        %358 = vmatprep.subr.mxu0 0.0
        %359 = vmatpush1.msra.mxu0 0.0
        %360 = vmatprep.subr.mxu0 0.0
        %361 = vmatpush1.msra.mxu0 0.0
        %362 = vmatprep.subr.mxu0 0.0
        %363 = vmatpush1.msra.mxu0 0.0
        %364 = vmatprep.subr.mxu0 0.0
        %365 = vmatpush1.msra.mxu0 0.0
        %366 = vmatprep.subr.mxu0 0.0
        %367 = vmatpush1.msra.mxu0 0.0
        %368 = vmatprep.subr.mxu0 0.0
        %369 = vmatpush1.msra.mxu0 0.0
        %370 = vmatprep.subr.mxu0 0.0
        %371 = vmatpush1.msra.mxu0 0.0
        %372 = vmatprep.subr.mxu0 0.0
        %373 = vmatpush1.msra.mxu0 0.0
        %374 = vmatprep.subr.mxu0 0.0
        %375 = vmatpush1.msra.mxu0 0.0
        %376 = vmatprep.subr.mxu0 0.0
        %377 = vmatpush1.msra.mxu0 0.0
        %378 = vmatprep.subr.mxu0 0.0
        %379 = vmatpush1.msra.mxu0 0.0
        %380 = vmatprep.subr.mxu0 0.0
        %381 = vmatpush1.msra.mxu0 0.0
        %382 = vmatprep.subr.mxu0 0.0
        %383 = vmatpush1.msra.mxu0 0.0
        %384 = vmatprep.subr.mxu0 0.0
        %385 = vmatpush1.msra.mxu0 0.0
        %386 = vmatprep.subr.mxu0 0.0
        %387 = vmatpush1.msra.mxu0 0.0
        %388 = vmatprep.subr.mxu0 0.0
        %389 = vmatpush1.msra.mxu0 0.0
        %390 = vmatprep.subr.mxu0 0.0
        %391 = vmatpush1.msra.mxu0 0.0
        %392 = vmatprep.subr.mxu0 0.0
        %393 = vmatpush1.msra.mxu0 0.0
        %394 = vmatprep.subr.mxu0 0.0
        %395 = vmatpush1.msra.mxu0 0.0
        %396 = vmatprep.subr.mxu0 0.0
        %397 = vmatpush1.msra.mxu0 0.0
        %398 = vmatprep.subr.mxu0 0.0
        %399 = vmatpush1.msra.mxu0 0.0
        %400 = vmatprep.subr.mxu0 0.0
        %401 = vmatpush1.msra.mxu0 0.0
        %402 = vmatprep.subr.mxu0 0.0
        %403 = vmatpush1.msra.mxu0 0.0
        %404 = vmatprep.mubr.f32.mxu0 0.0
        %405 = vmatmul.mubr.f32.gmra.mrb[0].mxu0 %v338
        %v406 = vpop.f32.mrb[0].mxu0
        %v407 = vadd.f32 %v334, %v406
        %v408 = vpop.f32.mrb[0].mxu0
        %409 = vdwg.mxu0
        %v410 = vxor.u32 %v407, 2147483648
        %v411 = vmul.f32 %v410, 1.442695
        %v412 = vpow.pop %v411
        %v413 = vadd.f32 %v412, 1.0
        %v414 = vrcp.pop %v413
        %v415 = vmul.f32 1.0, %v414
        %v416 = vld [vmem:[%s3] sm:$0xf]
        %v417 = vld [vmem:[%s4] sm:$0xf]
        %419 = vset.pattern.permute.xlu0 0
        %420 = vperm.xlu0 %419, %v417
        %v421 = vpop.permute.xlu0 %420
        %v424 = vsel %vm336, %v416, 0
        %426 = vmatprep.subr.mxu0 0.0
        %427 = vmatpush1.msra.mxu0 %v415
        %428 = vmatprep.subr.mxu0 0.0
        %429 = vmatpush1.msra.mxu0 0.0
        %430 = vmatprep.subr.mxu0 0.0
        %431 = vmatpush1.msra.mxu0 0.0
        %432 = vmatprep.subr.mxu0 0.0
        %433 = vmatpush1.msra.mxu0 0.0
        %434 = vmatprep.subr.mxu0 0.0
        %435 = vmatpush1.msra.mxu0 0.0
        %436 = vmatprep.subr.mxu0 0.0
        %437 = vmatpush1.msra.mxu0 0.0
        %438 = vmatprep.subr.mxu0 0.0
        %439 = vmatpush1.msra.mxu0 0.0
        %440 = vmatprep.subr.mxu0 0.0
        %441 = vmatpush1.msra.mxu0 0.0
        %442 = vmatprep.subr.mxu0 0.0
        %443 = vmatpush1.msra.mxu0 0.0
        %444 = vmatprep.subr.mxu0 0.0
        %445 = vmatpush1.msra.mxu0 0.0
        %446 = vmatprep.subr.mxu0 0.0
        %447 = vmatpush1.msra.mxu0 0.0
        %448 = vmatprep.subr.mxu0 0.0
        %449 = vmatpush1.msra.mxu0 0.0
        %450 = vmatprep.subr.mxu0 0.0
        %451 = vmatpush1.msra.mxu0 0.0
        %452 = vmatprep.subr.mxu0 0.0
        %453 = vmatpush1.msra.mxu0 0.0
        %454 = vmatprep.subr.mxu0 0.0
        %455 = vmatpush1.msra.mxu0 0.0
        %456 = vmatprep.subr.mxu0 0.0
        %457 = vmatpush1.msra.mxu0 0.0
        %458 = vmatprep.subr.mxu0 0.0
        %459 = vmatpush1.msra.mxu0 0.0
        %460 = vmatprep.subr.mxu0 0.0
        %461 = vmatpush1.msra.mxu0 0.0
        %462 = vmatprep.subr.mxu0 0.0
        %463 = vmatpush1.msra.mxu0 0.0
        %464 = vmatprep.subr.mxu0 0.0
        %465 = vmatpush1.msra.mxu0 0.0
        %466 = vmatprep.subr.mxu0 0.0
        %467 = vmatpush1.msra.mxu0 0.0
        %468 = vmatprep.subr.mxu0 0.0
        %469 = vmatpush1.msra.mxu0 0.0
        %470 = vmatprep.subr.mxu0 0.0
        %471 = vmatpush1.msra.mxu0 0.0
        %472 = vmatprep.subr.mxu0 0.0
        %473 = vmatpush1.msra.mxu0 0.0
        %474 = vmatprep.subr.mxu0 0.0
        %475 = vmatpush1.msra.mxu0 0.0
        %476 = vmatprep.subr.mxu0 0.0
        %477 = vmatpush1.msra.mxu0 0.0
        %478 = vmatprep.subr.mxu0 0.0
        %479 = vmatpush1.msra.mxu0 0.0
        %480 = vmatprep.subr.mxu0 0.0
        %481 = vmatpush1.msra.mxu0 0.0
        %482 = vmatprep.subr.mxu0 0.0
        %483 = vmatpush1.msra.mxu0 0.0
        %484 = vmatprep.subr.mxu0 0.0
        %485 = vmatpush1.msra.mxu0 0.0
        %486 = vmatprep.subr.mxu0 0.0
        %487 = vmatpush1.msra.mxu0 0.0
        %488 = vmatprep.subr.mxu0 0.0
        %489 = vmatpush1.msra.mxu0 0.0
        %490 = vmatprep.mubr.f32.mxu0 0.0
        %491 = vmatmul.mubr.f32.gmra.mrb[0].mxu0 %v424
        %v492 = vpop.f32.mrb[0].mxu0
        %v493 = vadd.f32 %v421, %v492
        %v494 = vpop.f32.mrb[0].mxu0
        %495 = vdwg.mxu0
        %v496 = vxor.u32 %v493, 2147483648
        %v497 = vmul.f32 %v496, 1.442695
        %v498 = vpow.pop %v497
        %v499 = vadd.f32 %v498, 1.0
        %v500 = vrcp.pop %v499
        %v501 = vmul.f32 1.0, %v500
        %v502 = vld [vmem:[%s5] sm:$0x3]
        %v503 = vld [vmem:[%s6] sm:$0x3]
        %505 = vset.pattern.permute.xlu0 0
        %506 = vperm.xlu0 %505, %v503
        %v507 = vpop.permute.xlu0 %506
        %vm509 = vcmask 31744
        %v511 = vsel %vm509, %v502, 0
        %vm513 = vcmask 1043456
        %v515 = vsel %vm513, %v501, 0
        %517 = vmatprep.subr.mxu0 0.0
        %518 = vmatpush1.msra.mxu0 %v515
        %519 = vmatprep.subr.mxu0 0.0
        %520 = vmatpush1.msra.mxu0 0.0
        %521 = vmatprep.subr.mxu0 0.0
        %522 = vmatpush1.msra.mxu0 0.0
        %523 = vmatprep.subr.mxu0 0.0
        %524 = vmatpush1.msra.mxu0 0.0
        %525 = vmatprep.subr.mxu0 0.0
        %526 = vmatpush1.msra.mxu0 0.0
        %527 = vmatprep.subr.mxu0 0.0
        %528 = vmatpush1.msra.mxu0 0.0
        %529 = vmatprep.subr.mxu0 0.0
        %530 = vmatpush1.msra.mxu0 0.0
        %531 = vmatprep.subr.mxu0 0.0
        %532 = vmatpush1.msra.mxu0 0.0
        %533 = vmatprep.subr.mxu0 0.0
        %534 = vmatpush1.msra.mxu0 0.0
        %535 = vmatprep.subr.mxu0 0.0
        %536 = vmatpush1.msra.mxu0 0.0
        %537 = vmatprep.subr.mxu0 0.0
        %538 = vmatpush1.msra.mxu0 0.0
        %539 = vmatprep.subr.mxu0 0.0
        %540 = vmatpush1.msra.mxu0 0.0
        %541 = vmatprep.subr.mxu0 0.0
        %542 = vmatpush1.msra.mxu0 0.0
        %543 = vmatprep.subr.mxu0 0.0
        %544 = vmatpush1.msra.mxu0 0.0
        %545 = vmatprep.subr.mxu0 0.0
        %546 = vmatpush1.msra.mxu0 0.0
        %547 = vmatprep.subr.mxu0 0.0
        %548 = vmatpush1.msra.mxu0 0.0
        %549 = vmatprep.subr.mxu0 0.0
        %550 = vmatpush1.msra.mxu0 0.0
        %551 = vmatprep.subr.mxu0 0.0
        %552 = vmatpush1.msra.mxu0 0.0
        %553 = vmatprep.subr.mxu0 0.0
        %554 = vmatpush1.msra.mxu0 0.0
        %555 = vmatprep.subr.mxu0 0.0
        %556 = vmatpush1.msra.mxu0 0.0
        %557 = vmatprep.subr.mxu0 0.0
        %558 = vmatpush1.msra.mxu0 0.0
        %559 = vmatprep.subr.mxu0 0.0
        %560 = vmatpush1.msra.mxu0 0.0
        %561 = vmatprep.subr.mxu0 0.0
        %562 = vmatpush1.msra.mxu0 0.0
        %563 = vmatprep.subr.mxu0 0.0
        %564 = vmatpush1.msra.mxu0 0.0
        %565 = vmatprep.subr.mxu0 0.0
        %566 = vmatpush1.msra.mxu0 0.0
        %567 = vmatprep.subr.mxu0 0.0
        %568 = vmatpush1.msra.mxu0 0.0
        %569 = vmatprep.subr.mxu0 0.0
        %570 = vmatpush1.msra.mxu0 0.0
        %571 = vmatprep.subr.mxu0 0.0
        %572 = vmatpush1.msra.mxu0 0.0
        %573 = vmatprep.subr.mxu0 0.0
        %574 = vmatpush1.msra.mxu0 0.0
        %575 = vmatprep.subr.mxu0 0.0
        %576 = vmatpush1.msra.mxu0 0.0
        %577 = vmatprep.subr.mxu0 0.0
        %578 = vmatpush1.msra.mxu0 0.0
        %579 = vmatprep.subr.mxu0 0.0
        %580 = vmatpush1.msra.mxu0 0.0
        %581 = vmatprep.mubr.f32.mxu0 0.0
        %582 = vmatmul.mubr.f32.gmra.mrb[0].mxu0 %v511
        %v583 = vpop.f32.mrb[0].mxu0
        %v584 = vadd.f32 %v507, %v583
        %v585 = vpop.f32.mrb[0].mxu0
        %586 = vdwg.mxu0
        %v587 = vxor.u32 %v584, 2147483648
        %v588 = vmul.f32 %v587, 1.442695
        %v589 = vpow.pop %v588
        %v590 = vadd.f32 %v589, 1.0
        %v591 = vrcp.pop %v590
        %v592 = vmul.f32 1.0, %v591
        %v593 = vld [vmem:[%s7] sm:$0x3]
        %v594 = vld [vmem:[%s8] sm:$0x3]
        %596 = vset.pattern.permute.xlu0 0
        %597 = vperm.xlu0 %596, %v594
        %v598 = vpop.permute.xlu0 %597
        %vm600 = vcmask 15360
        %v602 = vsel %vm600, %v593, 0
        %vm604 = vcmask 1041408
        %v606 = vsel %vm604, %v592, 0
        %608 = vmatprep.subr.mxu0 0.0
        %609 = vmatpush1.msra.mxu0 %v606
        %610 = vmatprep.subr.mxu0 0.0
        %611 = vmatpush1.msra.mxu0 0.0
        %612 = vmatprep.subr.mxu0 0.0
        %613 = vmatpush1.msra.mxu0 0.0
        %614 = vmatprep.subr.mxu0 0.0
        %615 = vmatpush1.msra.mxu0 0.0
        %616 = vmatprep.subr.mxu0 0.0
        %617 = vmatpush1.msra.mxu0 0.0
        %618 = vmatprep.subr.mxu0 0.0
        %619 = vmatpush1.msra.mxu0 0.0
        %620 = vmatprep.subr.mxu0 0.0
        %621 = vmatpush1.msra.mxu0 0.0
        %622 = vmatprep.subr.mxu0 0.0
        %623 = vmatpush1.msra.mxu0 0.0
        %624 = vmatprep.subr.mxu0 0.0
        %625 = vmatpush1.msra.mxu0 0.0
        %626 = vmatprep.subr.mxu0 0.0
        %627 = vmatpush1.msra.mxu0 0.0
        %628 = vmatprep.subr.mxu0 0.0
        %629 = vmatpush1.msra.mxu0 0.0
        %630 = vmatprep.subr.mxu0 0.0
        %631 = vmatpush1.msra.mxu0 0.0
        %632 = vmatprep.subr.mxu0 0.0
        %633 = vmatpush1.msra.mxu0 0.0
        %634 = vmatprep.subr.mxu0 0.0
        %635 = vmatpush1.msra.mxu0 0.0
        %636 = vmatprep.subr.mxu0 0.0
        %637 = vmatpush1.msra.mxu0 0.0
        %638 = vmatprep.subr.mxu0 0.0
        %639 = vmatpush1.msra.mxu0 0.0
        %640 = vmatprep.subr.mxu0 0.0
        %641 = vmatpush1.msra.mxu0 0.0
        %642 = vmatprep.subr.mxu0 0.0
        %643 = vmatpush1.msra.mxu0 0.0
        %644 = vmatprep.subr.mxu0 0.0
        %645 = vmatpush1.msra.mxu0 0.0
        %646 = vmatprep.subr.mxu0 0.0
        %647 = vmatpush1.msra.mxu0 0.0
        %648 = vmatprep.subr.mxu0 0.0
        %649 = vmatpush1.msra.mxu0 0.0
        %650 = vmatprep.subr.mxu0 0.0
        %651 = vmatpush1.msra.mxu0 0.0
        %652 = vmatprep.subr.mxu0 0.0
        %653 = vmatpush1.msra.mxu0 0.0
        %654 = vmatprep.subr.mxu0 0.0
        %655 = vmatpush1.msra.mxu0 0.0
        %656 = vmatprep.subr.mxu0 0.0
        %657 = vmatpush1.msra.mxu0 0.0
        %658 = vmatprep.subr.mxu0 0.0
        %659 = vmatpush1.msra.mxu0 0.0
        %660 = vmatprep.subr.mxu0 0.0
        %661 = vmatpush1.msra.mxu0 0.0
        %662 = vmatprep.subr.mxu0 0.0
        %663 = vmatpush1.msra.mxu0 0.0
        %664 = vmatprep.subr.mxu0 0.0
        %665 = vmatpush1.msra.mxu0 0.0
        %666 = vmatprep.subr.mxu0 0.0
        %667 = vmatpush1.msra.mxu0 0.0
        %668 = vmatprep.subr.mxu0 0.0
        %669 = vmatpush1.msra.mxu0 0.0
        %670 = vmatprep.subr.mxu0 0.0
        %671 = vmatpush1.msra.mxu0 0.0
        %672 = vmatprep.mubr.f32.mxu0 0.0
        %673 = vmatmul.mubr.f32.gmra.mrb[0].mxu0 %v602
        %v674 = vpop.f32.mrb[0].mxu0
        %v675 = vadd.f32 %v598, %v674
        %v676 = vpop.f32.mrb[0].mxu0
        %677 = vdwg.mxu0
        %678 = vst [vmem:[%s323] sm:$0x3] %v675
        %s679 = sand.u32 %s225, 1
        %s680 = scalar_lea.sflag [#allocation3], %s679
        %s681 = sand.u32 %s225, 1
        %s682 = smul.addr %s681, 2
        %s683 = scalar_lea.vmem [#allocation2], %s682
        // Predicated region
        $region57: #{mlp_forward_t.1} parent=55 // pred_check
          %p684 = pneg %p235
        $region58: #{mlp_forward_t.1} parent=55 // pred_check_branch
          %686 = sbr.rel (%p684) target = $region60
        $region59: #{mlp_forward_t.1} parent=55 // pred_region
          %s688 = ssub.s32 32, 32
          %689 = vsyncadd %s680, %s688
          %s690 = smul.addr %s23, 32
          %s691 = scalar_lea.hbm %s9, %s690
          %s693 = sshll.u32 %s683, 4
          %s694 = int_to_ptr.vmem [resolvable:$true] %s693
          %696 = dma.vmem_to_hbm [thread:$0]  %s694, 32, %s691, %s680
        $region60: #{mlp_forward_t.1} parent=55 // pred_fallthru
          _
      $region56: #{mlp_forward_t.1} parent=5 // pred_fallthru
        _
      %p697 = scmp.le.s32.totalorder 2, %s18
      // Predicated region
      $region61: #{mlp_forward_t.1} parent=5 // pred_check
        %p698 = pneg %p697
      $region62: #{mlp_forward_t.1} parent=5 // pred_check_branch
        %700 = sbr.rel (%p698) target = $region64
      $region63: #{mlp_forward_t.1} parent=5 // pred_region
        %s701 = ssub.s32 %s18, 2
        // Predicated region
        $region65: #{mlp_forward_t.1} parent=63 // pred_check
          %p702 = pneg %p241
        $region66: #{mlp_forward_t.1} parent=63 // pred_check_branch
          %704 = sbr.rel (%p702) target = $region68
        $region67: #{mlp_forward_t.1} parent=63 // pred_region
          %s705 = sand.u32 %s226, 1
          %s706 = scalar_lea.sflag [#allocation3], %s705
          %s707 = sand.u32 %s226, 1
          %s708 = smul.addr %s707, 2
          %s709 = scalar_lea.vmem [#allocation2], %s708
          %710 = dma.done %s706, 32
        $region68: #{mlp_forward_t.1} parent=63 // pred_fallthru
          _
      $region64: #{mlp_forward_t.1} parent=5 // pred_fallthru
        _
    $region6: #{mlp_forward_t.1} parent=1 // loop_footer
      %s22 = sadd.s32 1, %s18
    $region7: #{mlp_forward_t.1} parent=1 // loop_footer_branch
      %17 = sbr.rel target = $region3
    $region8: #{mlp_forward_t.1} parent=1 // loop_exit
      _
    %711 = vsyncpa [#allocation3], 1
    %s712 = scalar_lea.sflag [#allocation3], 1
    %713 = vsyncpa %s712, 1

</llo_original>
